<compile_context>
chip_gen: v5e
topology: v5e:2x2
jax: 0.10.0
libtpu: 0.0.40
codegen_flags: <defaults>
</compile_context>

<pallas_src>
import functools

import jax
import jax.numpy as jnp
from jax.experimental import pallas as pl
from jax.experimental.pallas import tpu as pltpu


def _critic_kernel(state_ref, action_ref,
                   w1s_ref, w1a_ref, b1_ref,
                   w2_ref, b2_ref,
                   w3_ref, b3_ref,
                   wq_ref, bq_ref,
                   q_ref, *, compute_dtype):
    # fc1: cat(state, action) @ W1  ==  state @ W1[:S] + action @ W1[S:]
    h = (jnp.dot(state_ref[...], w1s_ref[...], preferred_element_type=jnp.float32)
         + jnp.dot(action_ref[...], w1a_ref[...], preferred_element_type=jnp.float32)
         + b1_ref[...])
    h = jnp.maximum(h, 0.0)                                   # f32 elementwise
    # fc2 + ReLU (matmul operands in compute_dtype, accumulate f32)
    h = jnp.dot(h.astype(compute_dtype), w2_ref[...],
                preferred_element_type=jnp.float32) + b2_ref[...]
    h = jnp.maximum(h, 0.0)
    # fc3 + ReLU
    h = jnp.dot(h.astype(compute_dtype), w3_ref[...],
                preferred_element_type=jnp.float32) + b3_ref[...]
    h = jnp.maximum(h, 0.0)
    # Q head (out dim 1): VPU multiply + lane reduce instead of a 1-column MXU matmul.
    q = jnp.sum(h * wq_ref[...], axis=-1, keepdims=True) + bq_ref[...]
    q_ref[...] = q.astype(q_ref.dtype)


def _round_up(x, m):
    return (x + m - 1) // m * m


def critic_forward(state, action, params, *, tile_b=512,
                   compute_dtype=jnp.float32):
    """state: [B, S], action: [B, A]  ->  q: [B, 1] (float32).

    params = ((w1, b1), (w2, b2), (w3, b3), (wq, bq)) with w_i stored [in, out]
    and b_i stored [1, out].  compute_dtype controls matmul operand precision
    (use jnp.bfloat16 on v6e/v7x); accumulation and elementwise math stay f32.
    """
    B, S = state.shape
    _, A = action.shape
    (w1, b1), (w2, b2), (w3, b3), (wq, bq) = params

    # Split fc1 weight so the state/action concat never materializes in HBM.
    w1s = w1[:S].astype(compute_dtype)
    w1a = w1[S:].astype(compute_dtype)
    w2c = w2.astype(compute_dtype)
    w3c = w3.astype(compute_dtype)
    b1f = b1.astype(jnp.float32)
    b2f = b2.astype(jnp.float32)
    b3f = b3.astype(jnp.float32)
    wq_row = wq.reshape(1, -1).astype(jnp.float32)   # [1, fc3] for the VPU reduce
    bq_sc = bq.reshape(1, 1).astype(jnp.float32)

    state_c = state.astype(compute_dtype)
    action_c = action.astype(compute_dtype)

    # Batch tiling: tile_b is a multiple of 8 (sublanes); clamp for small batches
    # so we don't over-pad, keep it large (default 512) for realistic RL batches.
    tile_b = min(tile_b, _round_up(B, 128))
    tile_b = _round_up(tile_b, 8)
    b_pad = _round_up(B, tile_b)
    if b_pad != B:
        pad = b_pad - B
        state_c = jnp.pad(state_c, ((0, pad), (0, 0)))
        action_c = jnp.pad(action_c, ((0, pad), (0, 0)))
    num_tiles = b_pad // tile_b

    def batch_map(i):
        return (i, 0)

    def resident_map(i):
        return (0, 0)

    weight_args = (w1s, w1a, b1f, w2c, b2f, w3c, b3f, wq_row, bq_sc)
    in_specs = (
        [pl.BlockSpec((tile_b, S), batch_map),
         pl.BlockSpec((tile_b, A), batch_map)]
        + [pl.BlockSpec(w.shape, resident_map) for w in weight_args]
    )
    out_spec = pl.BlockSpec((tile_b, 1), batch_map)

    q_pad = pl.pallas_call(
        functools.partial(_critic_kernel, compute_dtype=compute_dtype),
        out_shape=jax.ShapeDtypeStruct((b_pad, 1), jnp.float32),
        grid=(num_tiles,),
        in_specs=in_specs,
        out_specs=out_spec,
        compiler_params=pltpu.CompilerParams(
            dimension_semantics=("parallel",),   # v7x: split batch across 2 TCs
        ),
    )(state_c, action_c, *weight_args)

    return q_pad[:B]


def init_linear(key, fan_in, fan_out):
    """Deterministic init mimicking nn.Linear default (uniform +/- 1/sqrt(fan_in)).
    Weight returned as [in, out] (transposed from PyTorch convention)."""
    kw, kb = jax.random.split(key)
    bound = 1.0 / jnp.sqrt(jnp.float32(fan_in))
    w = jax.random.uniform(kw, (fan_in, fan_out), jnp.float32, -bound, bound)
    b = jax.random.uniform(kb, (1, fan_out), jnp.float32, -bound, bound)
    return w, b


def _reference(state, action, params):
    x = jnp.concatenate([state, action], axis=1)
    h = x
    for (w, b) in params[:-1]:
        h = jnp.maximum(h @ w + b, 0.0)
    wq, bq = params[-1]
    return h @ wq + bq


if __name__ == "__main__":
    # Small shapes consistent with the module: input_dims = state+goal dims + action dims.
    state_dim = 12      # state + goal concatenated upstream
    action_dim = 4
    input_dims = state_dim + action_dim   # 16
    fc1_dims, fc2_dims, fc3_dims = 32, 32, 32

    key = jax.random.PRNGKey(0)
    k_state, k_action, k1, k2, k3, kq, k_big = jax.random.split(key, 7)

    params = (
        init_linear(k1, input_dims, fc1_dims),
        init_linear(k2, fc1_dims, fc2_dims),
        init_linear(k3, fc2_dims, fc3_dims),
        init_linear(kq, fc3_dims, 1),
    )

    # --- small batch, f32 path (strict check) ---
    batch = 2
    state = jax.random.normal(k_state, (batch, state_dim), jnp.float32)
    action = jax.random.normal(k_action, (batch, action_dim), jnp.float32)

    q = critic_forward(state, action, params)
    jax.block_until_ready(q)
    q_ref = _reference(state, action, params)
    assert q.shape == (batch, 1)
    assert jnp.allclose(q, q_ref, atol=1e-5, rtol=1e-5), "f32 path mismatch"

    # --- multi-tile batch with remainder (exercise grid + padding), f32 ---
    batch2 = 300
    ks, ka = jax.random.split(k_big)
    state2 = jax.random.normal(ks, (batch2, state_dim), jnp.float32)
    action2 = jax.random.normal(ka, (batch2, action_dim), jnp.float32)
    q2 = critic_forward(state2, action2, params, tile_b=128)
    jax.block_until_ready(q2)
    q2_ref = _reference(state2, action2, params)
    assert q2.shape == (batch2, 1)
    assert jnp.allclose(q2, q2_ref, atol=1e-5, rtol=1e-5), "tiled f32 path mismatch"

    # --- bf16 matmul operands (v6e/v7x fast path), f32 accumulation (loose check) ---
    q_bf16 = critic_forward(state2, action2, params, tile_b=128,
                            compute_dtype=jnp.bfloat16)
    jax.block_until_ready(q_bf16)
    assert jnp.allclose(q_bf16, q2_ref, atol=5e-2, rtol=5e-2), "bf16 path mismatch"

    print("KERNEL_OK")
</pallas_src>

<mosaic_0001>
module attributes {stable_mosaic.version = 11 : i64} {
  func.func @_critic_kernel(%arg0: i32, %arg1: memref<128x12xf32, #tpu.memory_space<vmem>>, %arg2: memref<128x4xf32, #tpu.memory_space<vmem>>, %arg3: memref<12x32xf32, #tpu.memory_space<vmem>>, %arg4: memref<4x32xf32, #tpu.memory_space<vmem>>, %arg5: memref<1x32xf32, #tpu.memory_space<vmem>>, %arg6: memref<32x32xf32, #tpu.memory_space<vmem>>, %arg7: memref<1x32xf32, #tpu.memory_space<vmem>>, %arg8: memref<32x32xf32, #tpu.memory_space<vmem>>, %arg9: memref<1x32xf32, #tpu.memory_space<vmem>>, %arg10: memref<1x32xf32, #tpu.memory_space<vmem>>, %arg11: memref<1x1xf32, #tpu.memory_space<vmem>>, %arg12: memref<128x1xf32, #tpu.memory_space<vmem>>) attributes {dimension_semantics = [#tpu.dimension_semantics<parallel>], iteration_bounds = array<i64: 1>, scalar_prefetch = 0 : i64, scratch_operands = 0 : i64, tpu.core_type = #tpu.core_type<tc>, window_params = [{transform_indices = @transform_0, window_bounds = array<i64: 128, 12>}, {transform_indices = @transform_1, window_bounds = array<i64: 128, 4>}, {pipeline_mode = #tpu.pipeline_mode<synchronous>, transform_indices = @transform_2, window_bounds = array<i64: 12, 32>}, {pipeline_mode = #tpu.pipeline_mode<synchronous>, transform_indices = @transform_3, window_bounds = array<i64: 4, 32>}, {pipeline_mode = #tpu.pipeline_mode<synchronous>, transform_indices = @transform_4, window_bounds = array<i64: 1, 32>}, {pipeline_mode = #tpu.pipeline_mode<synchronous>, transform_indices = @transform_5, window_bounds = array<i64: 32, 32>}, {pipeline_mode = #tpu.pipeline_mode<synchronous>, transform_indices = @transform_6, window_bounds = array<i64: 1, 32>}, {pipeline_mode = #tpu.pipeline_mode<synchronous>, transform_indices = @transform_7, window_bounds = array<i64: 32, 32>}, {pipeline_mode = #tpu.pipeline_mode<synchronous>, transform_indices = @transform_8, window_bounds = array<i64: 1, 32>}, {pipeline_mode = #tpu.pipeline_mode<synchronous>, transform_indices = @transform_9, window_bounds = array<i64: 1, 32>}, {pipeline_mode = #tpu.pipeline_mode<synchronous>, transform_indices = @transform_10, window_bounds = array<i64: 1, 1>}, {transform_indices = @transform_11, window_bounds = array<i64: 128, 1>}]} {
    %c0 = arith.constant 0 : index
    %c0_0 = arith.constant 0 : index
    %0 = vector.load %arg1[%c0, %c0_0] : memref<128x12xf32, #tpu.memory_space<vmem>>, vector<128x12xf32>
    %c0_1 = arith.constant 0 : index
    %c0_2 = arith.constant 0 : index
    %1 = vector.load %arg3[%c0_1, %c0_2] : memref<12x32xf32, #tpu.memory_space<vmem>>, vector<12x32xf32>
    %cst = arith.constant dense<0.000000e+00> : vector<128x32xf32>
    %2 = tpu.matmul %0, %1, %cst {dimension_numbers = #tpu.dot_dimension_numbers<[1], [0], [0], [1], [0, 0, 1, 1], [], []>} : vector<128x12xf32>, vector<12x32xf32>, vector<128x32xf32> -> vector<128x32xf32>
    %c0_3 = arith.constant 0 : index
    %c0_4 = arith.constant 0 : index
    %3 = vector.load %arg2[%c0_3, %c0_4] : memref<128x4xf32, #tpu.memory_space<vmem>>, vector<128x4xf32>
    %c0_5 = arith.constant 0 : index
    %c0_6 = arith.constant 0 : index
    %4 = vector.load %arg4[%c0_5, %c0_6] : memref<4x32xf32, #tpu.memory_space<vmem>>, vector<4x32xf32>
    %cst_7 = arith.constant dense<0.000000e+00> : vector<128x32xf32>
    %5 = tpu.matmul %3, %4, %cst_7 {dimension_numbers = #tpu.dot_dimension_numbers<[1], [0], [0], [1], [0, 0, 1, 1], [], []>} : vector<128x4xf32>, vector<4x32xf32>, vector<128x32xf32> -> vector<128x32xf32>
    %6 = arith.addf %2, %5 : vector<128x32xf32>
    %c0_8 = arith.constant 0 : index
    %c0_9 = arith.constant 0 : index
    %7 = vector.load %arg5[%c0_8, %c0_9] : memref<1x32xf32, #tpu.memory_space<vmem>>, vector<1x32xf32>
    %8 = vector.broadcast %7 : vector<1x32xf32> to vector<128x32xf32>
    %9 = arith.addf %6, %8 : vector<128x32xf32>
    %cst_10 = arith.constant 0.000000e+00 : f32
    %10 = vector.broadcast %cst_10 : f32 to vector<128x32xf32>
    %11 = arith.maximumf %9, %10 : vector<128x32xf32>
    %c0_11 = arith.constant 0 : index
    %c0_12 = arith.constant 0 : index
    %12 = vector.load %arg6[%c0_11, %c0_12] : memref<32x32xf32, #tpu.memory_space<vmem>>, vector<32x32xf32>
    %cst_13 = arith.constant dense<0.000000e+00> : vector<128x32xf32>
    %13 = tpu.matmul %11, %12, %cst_13 {dimension_numbers = #tpu.dot_dimension_numbers<[1], [0], [0], [1], [0, 0, 1, 1], [], []>} : vector<128x32xf32>, vector<32x32xf32>, vector<128x32xf32> -> vector<128x32xf32>
    %c0_14 = arith.constant 0 : index
    %c0_15 = arith.constant 0 : index
    %14 = vector.load %arg7[%c0_14, %c0_15] : memref<1x32xf32, #tpu.memory_space<vmem>>, vector<1x32xf32>
    %15 = vector.broadcast %14 : vector<1x32xf32> to vector<128x32xf32>
    %16 = arith.addf %13, %15 : vector<128x32xf32>
    %cst_16 = arith.constant 0.000000e+00 : f32
    %17 = vector.broadcast %cst_16 : f32 to vector<128x32xf32>
    %18 = arith.maximumf %16, %17 : vector<128x32xf32>
    %c0_17 = arith.constant 0 : index
    %c0_18 = arith.constant 0 : index
    %19 = vector.load %arg8[%c0_17, %c0_18] : memref<32x32xf32, #tpu.memory_space<vmem>>, vector<32x32xf32>
    %cst_19 = arith.constant dense<0.000000e+00> : vector<128x32xf32>
    %20 = tpu.matmul %18, %19, %cst_19 {dimension_numbers = #tpu.dot_dimension_numbers<[1], [0], [0], [1], [0, 0, 1, 1], [], []>} : vector<128x32xf32>, vector<32x32xf32>, vector<128x32xf32> -> vector<128x32xf32>
    %c0_20 = arith.constant 0 : index
    %c0_21 = arith.constant 0 : index
    %21 = vector.load %arg9[%c0_20, %c0_21] : memref<1x32xf32, #tpu.memory_space<vmem>>, vector<1x32xf32>
    %22 = vector.broadcast %21 : vector<1x32xf32> to vector<128x32xf32>
    %23 = arith.addf %20, %22 : vector<128x32xf32>
    %cst_22 = arith.constant 0.000000e+00 : f32
    %24 = vector.broadcast %cst_22 : f32 to vector<128x32xf32>
    %25 = arith.maximumf %23, %24 : vector<128x32xf32>
    %c0_23 = arith.constant 0 : index
    %c0_24 = arith.constant 0 : index
    %26 = vector.load %arg10[%c0_23, %c0_24] : memref<1x32xf32, #tpu.memory_space<vmem>>, vector<1x32xf32>
    %27 = vector.broadcast %26 : vector<1x32xf32> to vector<128x32xf32>
    %28 = arith.mulf %25, %27 : vector<128x32xf32>
    %cst_25 = arith.constant dense<0.000000e+00> : vector<128xf32>
    %29 = vector.multi_reduction <add>, %28, %cst_25 [1] : vector<128x32xf32> to vector<128xf32>
    %30 = vector.shape_cast %29 : vector<128xf32> to vector<128x1xf32>
    %c0_26 = arith.constant 0 : index
    %c0_27 = arith.constant 0 : index
    %31 = vector.load %arg11[%c0_26, %c0_27] : memref<1x1xf32, #tpu.memory_space<vmem>>, vector<1x1xf32>
    %32 = vector.broadcast %31 : vector<1x1xf32> to vector<128x1xf32>
    %33 = arith.addf %30, %32 : vector<128x1xf32>
    %c0_28 = arith.constant 0 : index
    %c0_29 = arith.constant 0 : index
    %34 = vector.load %arg12[%c0_28, %c0_29] : memref<128x1xf32, #tpu.memory_space<vmem>>, vector<128x1xf32>
    tpu.vector_store %arg12[%c0_28, %c0_29], %33 {strides = array<i32>} : memref<128x1xf32, #tpu.memory_space<vmem>>, vector<128x1xf32>,
    return
  }
  func.func @transform_0(%arg0: i32) -> (i32, i32) {
    %c0_i32 = arith.constant 0 : i32
    %c0_i32_0 = arith.constant 0 : i32
    return %arg0, %c0_i32 : i32, i32
  }
  func.func @transform_1(%arg0: i32) -> (i32, i32) {
    %c0_i32 = arith.constant 0 : i32
    %c0_i32_0 = arith.constant 0 : i32
    return %arg0, %c0_i32 : i32, i32
  }
  func.func @transform_2(%arg0: i32) -> (i32, i32) {
    %c0_i32 = arith.constant 0 : i32
    %c0_i32_0 = arith.constant 0 : i32
    %c0_i32_1 = arith.constant 0 : i32
    return %c0_i32, %c0_i32_0 : i32, i32
  }
  func.func @transform_3(%arg0: i32) -> (i32, i32) {
    %c0_i32 = arith.constant 0 : i32
    %c0_i32_0 = arith.constant 0 : i32
    %c0_i32_1 = arith.constant 0 : i32
    return %c0_i32, %c0_i32_0 : i32, i32
  }
  func.func @transform_4(%arg0: i32) -> (i32, i32) {
    %c0_i32 = arith.constant 0 : i32
    %c0_i32_0 = arith.constant 0 : i32
    %c0_i32_1 = arith.constant 0 : i32
    return %c0_i32, %c0_i32_0 : i32, i32
  }
  func.func @transform_5(%arg0: i32) -> (i32, i32) {
    %c0_i32 = arith.constant 0 : i32
    %c0_i32_0 = arith.constant 0 : i32
    %c0_i32_1 = arith.constant 0 : i32
    return %c0_i32, %c0_i32_0 : i32, i32
  }
  func.func @transform_6(%arg0: i32) -> (i32, i32) {
    %c0_i32 = arith.constant 0 : i32
    %c0_i32_0 = arith.constant 0 : i32
    %c0_i32_1 = arith.constant 0 : i32
    return %c0_i32, %c0_i32_0 : i32, i32
  }
  func.func @transform_7(%arg0: i32) -> (i32, i32) {
    %c0_i32 = arith.constant 0 : i32
    %c0_i32_0 = arith.constant 0 : i32
    %c0_i32_1 = arith.constant 0 : i32
    return %c0_i32, %c0_i32_0 : i32, i32
  }
  func.func @transform_8(%arg0: i32) -> (i32, i32) {
    %c0_i32 = arith.constant 0 : i32
    %c0_i32_0 = arith.constant 0 : i32
    %c0_i32_1 = arith.constant 0 : i32
    return %c0_i32, %c0_i32_0 : i32, i32
  }
  func.func @transform_9(%arg0: i32) -> (i32, i32) {
    %c0_i32 = arith.constant 0 : i32
    %c0_i32_0 = arith.constant 0 : i32
    %c0_i32_1 = arith.constant 0 : i32
    return %c0_i32, %c0_i32_0 : i32, i32
  }
  func.func @transform_10(%arg0: i32) -> (i32, i32) {
    %c0_i32 = arith.constant 0 : i32
    %c0_i32_0 = arith.constant 0 : i32
    %c0_i32_1 = arith.constant 0 : i32
    return %c0_i32, %c0_i32_0 : i32, i32
  }
  func.func @transform_11(%arg0: i32) -> (i32, i32) {
    %c0_i32 = arith.constant 0 : i32
    %c0_i32_0 = arith.constant 0 : i32
    return %arg0, %c0_i32 : i32, i32
  }
}

</mosaic_0001>

<llo_original>
// kernel: tpu_custom_call.1
$region0: #{tpu_custom_call.1}
  #allocation0 [shape = 'u32[]', space=smem, size = 0x4, offset = 0x4, fixed_abs, tag = 'smem constant byte address 0x4 - core index']
  #allocation1 [shape = 'u32[72,128]{1,0:T(1,128)}', space=vmem, size = 0x9000, scoped, tag = 'internal scratch']
  #allocation2 [shape = 'f32[1,1]{1,0:T(1,128)S(1)}', space=vmem, size = 0x200, scoped, tag = 'scoped memory for tpu_custom_call.1']
  %s0 = inlined_call_operand.vmem [shape: f32[128,12], index: 0, kind: input, shape index: {}]
  %s1 = inlined_call_operand.vmem [shape: f32[128,4], index: 1, kind: input, shape index: {}]
  %s2 = inlined_call_operand.vmem [shape: f32[12,32], index: 2, kind: input, shape index: {}]
  %s3 = inlined_call_operand.vmem [shape: f32[4,32], index: 3, kind: input, shape index: {}]
  %s4 = inlined_call_operand.vmem [shape: f32[1,32], index: 4, kind: input, shape index: {}]
  %s5 = inlined_call_operand.vmem [shape: f32[32,32], index: 5, kind: input, shape index: {}]
  %s6 = inlined_call_operand.vmem [shape: f32[1,32], index: 6, kind: input, shape index: {}]
  %s7 = inlined_call_operand.vmem [shape: f32[32,32], index: 7, kind: input, shape index: {}]
  %s8 = inlined_call_operand.vmem [shape: f32[1,32], index: 8, kind: input, shape index: {}]
  %s9 = inlined_call_operand.vmem [shape: f32[1,32], index: 9, kind: input, shape index: {}]
  %s10 = inlined_call_operand.<no memory space> [shape: f32[1,1], index: 10, kind: input, shape index: {}]
  %s11 = inlined_call_operand.vmem [shape: f32[128,1], index: 11, kind: output, shape index: {}]
  %s12 = sld [smem:[#allocation0]]
  $region54: #{tpu_custom_call.1} parent=0
    _
  %s14 = ssub.s32 1, %s12
  %s15 = scalar_select 0, %s14, %s12
  %v16 = vstv %s10
  %17 = vst [vmem:[#allocation2] sm:$0x1] %v16
  // Predicated region
  $region2: #{tpu_custom_call.1} parent=0 // pred_check
    _
  $region3: #{tpu_custom_call.1} parent=0 // pred_check_branch
    %19 = sbr.rel (0) target = $region5
  $region4: #{tpu_custom_call.1} parent=0 // pred_region
    _
  $region5: #{tpu_custom_call.1} parent=0 // pred_fallthru
    _
  // Predicated region
  $region6: #{tpu_custom_call.1} parent=0 // pred_check
    _
  $region7: #{tpu_custom_call.1} parent=0 // pred_check_branch
    %21 = sbr.rel (0) target = $region9
  $region8: #{tpu_custom_call.1} parent=0 // pred_region
    _
  $region9: #{tpu_custom_call.1} parent=0 // pred_fallthru
    _
  // Predicated region
  $region10: #{tpu_custom_call.1} parent=0 // pred_check
    _
  $region11: #{tpu_custom_call.1} parent=0 // pred_check_branch
    %23 = sbr.rel (0) target = $region13
  $region12: #{tpu_custom_call.1} parent=0 // pred_region
    _
  $region13: #{tpu_custom_call.1} parent=0 // pred_fallthru
    _
  // Predicated region
  $region14: #{tpu_custom_call.1} parent=0 // pred_check
    _
  $region15: #{tpu_custom_call.1} parent=0 // pred_check_branch
    %25 = sbr.rel (0) target = $region17
  $region16: #{tpu_custom_call.1} parent=0 // pred_region
    _
  $region17: #{tpu_custom_call.1} parent=0 // pred_fallthru
    _
  // Predicated region
  $region18: #{tpu_custom_call.1} parent=0 // pred_check
    _
  $region19: #{tpu_custom_call.1} parent=0 // pred_check_branch
    %27 = sbr.rel (0) target = $region21
  $region20: #{tpu_custom_call.1} parent=0 // pred_region
    _
  $region21: #{tpu_custom_call.1} parent=0 // pred_fallthru
    _
  // Predicated region
  $region22: #{tpu_custom_call.1} parent=0 // pred_check
    _
  $region23: #{tpu_custom_call.1} parent=0 // pred_check_branch
    %29 = sbr.rel (0) target = $region25
  $region24: #{tpu_custom_call.1} parent=0 // pred_region
    _
  $region25: #{tpu_custom_call.1} parent=0 // pred_fallthru
    _
  // Predicated region
  $region26: #{tpu_custom_call.1} parent=0 // pred_check
    _
  $region27: #{tpu_custom_call.1} parent=0 // pred_check_branch
    %31 = sbr.rel (0) target = $region29
  $region28: #{tpu_custom_call.1} parent=0 // pred_region
    _
  $region29: #{tpu_custom_call.1} parent=0 // pred_fallthru
    _
  // Predicated region
  $region30: #{tpu_custom_call.1} parent=0 // pred_check
    _
  $region31: #{tpu_custom_call.1} parent=0 // pred_check_branch
    %33 = sbr.rel (0) target = $region33
  $region32: #{tpu_custom_call.1} parent=0 // pred_region
    _
  $region33: #{tpu_custom_call.1} parent=0 // pred_fallthru
    _
  // Predicated region
  $region34: #{tpu_custom_call.1} parent=0 // pred_check
    _
  $region35: #{tpu_custom_call.1} parent=0 // pred_check_branch
    %35 = sbr.rel (0) target = $region37
  $region36: #{tpu_custom_call.1} parent=0 // pred_region
    _
  $region37: #{tpu_custom_call.1} parent=0 // pred_fallthru
    _
  // Predicated region
  $region38: #{tpu_custom_call.1} parent=0 // pred_check
    _
  $region39: #{tpu_custom_call.1} parent=0 // pred_check_branch
    %37 = sbr.rel (0) target = $region41
  $region40: #{tpu_custom_call.1} parent=0 // pred_region
    _
  $region41: #{tpu_custom_call.1} parent=0 // pred_fallthru
    _
  // Predicated region
  $region42: #{tpu_custom_call.1} parent=0 // pred_check
    _
  $region43: #{tpu_custom_call.1} parent=0 // pred_check_branch
    %39 = sbr.rel (0) target = $region45
  $region44: #{tpu_custom_call.1} parent=0 // pred_region
    _
  $region45: #{tpu_custom_call.1} parent=0 // pred_fallthru
    _
  %v40 = vld [vmem:[%s0] sm:$0xff]
  %v41 = vld [vmem:[%s0 + $0x8] sm:$0xff]
  %v42 = vld [vmem:[%s0 + $0x10] sm:$0xff]
  %v43 = vld [vmem:[%s0 + $0x18] sm:$0xff]
  %v44 = vld [vmem:[%s0 + $0x20] sm:$0xff]
  %v45 = vld [vmem:[%s0 + $0x28] sm:$0xff]
  %v46 = vld [vmem:[%s0 + $0x30] sm:$0xff]
  %v47 = vld [vmem:[%s0 + $0x38] sm:$0xff]
  %v48 = vld [vmem:[%s0 + $0x40] sm:$0xff]
  %v49 = vld [vmem:[%s0 + $0x48] sm:$0xff]
  %v50 = vld [vmem:[%s0 + $0x50] sm:$0xff]
  %v51 = vld [vmem:[%s0 + $0x58] sm:$0xff]
  %v52 = vld [vmem:[%s0 + $0x60] sm:$0xff]
  %v53 = vld [vmem:[%s0 + $0x68] sm:$0xff]
  %v54 = vld [vmem:[%s0 + $0x70] sm:$0xff]
  %v55 = vld [vmem:[%s0 + $0x78] sm:$0xff]
  %v56 = vld [vmem:[%s2] sm:$0xff]
  %v57 = vld [vmem:[%s2 + $0x8] sm:$0xf]
  %v58 = vld [vmem:[%s1] sm:$0xff]
  %v59 = vld [vmem:[%s1 + $0x8] sm:$0xff]
  %v60 = vld [vmem:[%s1 + $0x10] sm:$0xff]
  %v61 = vld [vmem:[%s1 + $0x18] sm:$0xff]
  %v62 = vld [vmem:[%s1 + $0x20] sm:$0xff]
  %v63 = vld [vmem:[%s1 + $0x28] sm:$0xff]
  %v64 = vld [vmem:[%s1 + $0x30] sm:$0xff]
  %v65 = vld [vmem:[%s1 + $0x38] sm:$0xff]
  %v66 = vld [vmem:[%s1 + $0x40] sm:$0xff]
  %v67 = vld [vmem:[%s1 + $0x48] sm:$0xff]
  %v68 = vld [vmem:[%s1 + $0x50] sm:$0xff]
  %v69 = vld [vmem:[%s1 + $0x58] sm:$0xff]
  %v70 = vld [vmem:[%s1 + $0x60] sm:$0xff]
  %v71 = vld [vmem:[%s1 + $0x68] sm:$0xff]
  %v72 = vld [vmem:[%s1 + $0x70] sm:$0xff]
  %v73 = vld [vmem:[%s1 + $0x78] sm:$0xff]
  %v74 = vld [vmem:[%s3] sm:$0xf]
  %vm75 = vcmask 31744
  %v77 = vsel %vm75, %v58, 0
  %v80 = vsel %vm75, %v59, 0
  %v83 = vsel %vm75, %v60, 0
  %v86 = vsel %vm75, %v61, 0
  %v89 = vsel %vm75, %v62, 0
  %v92 = vsel %vm75, %v63, 0
  %v95 = vsel %vm75, %v64, 0
  %v98 = vsel %vm75, %v65, 0
  %v101 = vsel %vm75, %v66, 0
  %v104 = vsel %vm75, %v67, 0
  %v107 = vsel %vm75, %v68, 0
  %v110 = vsel %vm75, %v69, 0
  %v113 = vsel %vm75, %v70, 0
  %v116 = vsel %vm75, %v71, 0
  %v119 = vsel %vm75, %v72, 0
  %v122 = vsel %vm75, %v73, 0
  %vm124 = vcmask 1043456
  %v126 = vsel %vm124, %v74, 0
  %128 = vmatpush.msra.mxu0 0.0
  %129 = vmatpush.msra.mxu0 0.0
  %130 = vmatpush.msra.mxu0 0.0
  %131 = vmatpush.msra.mxu0 0.0
  %132 = vmatpush.msra.mxu0 0.0
  %133 = vmatpush.msra.mxu0 0.0
  %134 = vmatpush.msra.mxu0 0.0
  %135 = vmatpush.msra.mxu0 0.0
  %136 = vmatpush.msra.mxu0 0.0
  %137 = vmatpush.msra.mxu0 0.0
  %138 = vmatpush.msra.mxu0 0.0
  %139 = vmatpush.msra.mxu0 0.0
  %140 = vmatpush.msra.mxu0 0.0
  %141 = vmatpush.msra.mxu0 0.0
  %142 = vmatpush.msra.mxu0 0.0
  %143 = vmatpush.msra.mxu0 %v126
  %144 = vmatmul.f32.gmra.mxu0 %v77
  %v145 = vpop.f32.mrf.mxu0
  %v146 = vadd.f32 0.0, %v145
  %147 = vmatmul.f32.gmra.mxu0 %v80
  %v148 = vpop.f32.mrf.mxu0
  %v149 = vadd.f32 0.0, %v148
  %150 = vmatmul.f32.gmra.mxu0 %v83
  %v151 = vpop.f32.mrf.mxu0
  %v152 = vadd.f32 0.0, %v151
  %153 = vmatmul.f32.gmra.mxu0 %v86
  %v154 = vpop.f32.mrf.mxu0
  %v155 = vadd.f32 0.0, %v154
  %156 = vmatmul.f32.gmra.mxu0 %v89
  %v157 = vpop.f32.mrf.mxu0
  %v158 = vadd.f32 0.0, %v157
  %159 = vmatmul.f32.gmra.mxu0 %v92
  %v160 = vpop.f32.mrf.mxu0
  %v161 = vadd.f32 0.0, %v160
  %162 = vmatmul.f32.gmra.mxu0 %v95
  %v163 = vpop.f32.mrf.mxu0
  %v164 = vadd.f32 0.0, %v163
  %165 = vmatmul.f32.gmra.mxu0 %v98
  %v166 = vpop.f32.mrf.mxu0
  %v167 = vadd.f32 0.0, %v166
  %168 = vmatmul.f32.gmra.mxu0 %v101
  %v169 = vpop.f32.mrf.mxu0
  %v170 = vadd.f32 0.0, %v169
  %171 = vmatmul.f32.gmra.mxu0 %v104
  %v172 = vpop.f32.mrf.mxu0
  %v173 = vadd.f32 0.0, %v172
  %174 = vmatmul.f32.gmra.mxu0 %v107
  %v175 = vpop.f32.mrf.mxu0
  %v176 = vadd.f32 0.0, %v175
  %177 = vmatmul.f32.gmra.mxu0 %v110
  %v178 = vpop.f32.mrf.mxu0
  %v179 = vadd.f32 0.0, %v178
  %180 = vmatmul.f32.gmra.mxu0 %v113
  %v181 = vpop.f32.mrf.mxu0
  %v182 = vadd.f32 0.0, %v181
  %183 = vmatmul.f32.gmra.mxu0 %v116
  %v184 = vpop.f32.mrf.mxu0
  %v185 = vadd.f32 0.0, %v184
  %186 = vmatmul.f32.gmra.mxu0 %v119
  %v187 = vpop.f32.mrf.mxu0
  %v188 = vadd.f32 0.0, %v187
  %189 = vmatmul.f32.gmra.mxu0 %v122
  %v190 = vpop.f32.mrf.mxu0
  %v191 = vadd.f32 0.0, %v190
  %192 = vdwg.mxu0
  %vm193 = vcmask 97280
  %v195 = vsel %vm193, %v40, 0
  %v198 = vsel %vm193, %v41, 0
  %v201 = vsel %vm193, %v42, 0
  %v204 = vsel %vm193, %v43, 0
  %v207 = vsel %vm193, %v44, 0
  %v210 = vsel %vm193, %v45, 0
  %v213 = vsel %vm193, %v46, 0
  %v216 = vsel %vm193, %v47, 0
  %v219 = vsel %vm193, %v48, 0
  %v222 = vsel %vm193, %v49, 0
  %v225 = vsel %vm193, %v50, 0
  %v228 = vsel %vm193, %v51, 0
  %v231 = vsel %vm193, %v52, 0
  %v234 = vsel %vm193, %v53, 0
  %v237 = vsel %vm193, %v54, 0
  %v240 = vsel %vm193, %v55, 0
  %v243 = vsel %vm124, %v57, 0
  %245 = vmatpush.msra.mxu0 0.0
  %246 = vmatpush.msra.mxu0 0.0
  %247 = vmatpush.msra.mxu0 0.0
  %248 = vmatpush.msra.mxu0 0.0
  %249 = vmatpush.msra.mxu0 0.0
  %250 = vmatpush.msra.mxu0 0.0
  %251 = vmatpush.msra.mxu0 0.0
  %252 = vmatpush.msra.mxu0 0.0
  %253 = vmatpush.msra.mxu0 0.0
  %254 = vmatpush.msra.mxu0 0.0
  %255 = vmatpush.msra.mxu0 0.0
  %256 = vmatpush.msra.mxu0 0.0
  %257 = vmatpush.msra.mxu0 0.0
  %258 = vmatpush.msra.mxu0 0.0
  %259 = vmatpush.msra.mxu0 %v243
  %260 = vmatpush.msra.mxu0 %v56
  %261 = vmatmul.f32.gmra.mxu0 %v195
  %v262 = vpop.f32.mrf.mxu0
  %v263 = vadd.f32 %v146, %v262
  %264 = vmatmul.f32.gmra.mxu0 %v198
  %v265 = vpop.f32.mrf.mxu0
  %v266 = vadd.f32 %v149, %v265
  %267 = vmatmul.f32.gmra.mxu0 %v201
  %v268 = vpop.f32.mrf.mxu0
  %v269 = vadd.f32 %v152, %v268
  %270 = vmatmul.f32.gmra.mxu0 %v204
  %v271 = vpop.f32.mrf.mxu0
  %v272 = vadd.f32 %v155, %v271
  %273 = vmatmul.f32.gmra.mxu0 %v207
  %v274 = vpop.f32.mrf.mxu0
  %v275 = vadd.f32 %v158, %v274
  %276 = vmatmul.f32.gmra.mxu0 %v210
  %v277 = vpop.f32.mrf.mxu0
  %v278 = vadd.f32 %v161, %v277
  %279 = vmatmul.f32.gmra.mxu0 %v213
  %v280 = vpop.f32.mrf.mxu0
  %v281 = vadd.f32 %v164, %v280
  %282 = vmatmul.f32.gmra.mxu0 %v216
  %v283 = vpop.f32.mrf.mxu0
  %v284 = vadd.f32 %v167, %v283
  %285 = vmatmul.f32.gmra.mxu0 %v219
  %v286 = vpop.f32.mrf.mxu0
  %v287 = vadd.f32 %v170, %v286
  %288 = vmatmul.f32.gmra.mxu0 %v222
  %v289 = vpop.f32.mrf.mxu0
  %v290 = vadd.f32 %v173, %v289
  %291 = vmatmul.f32.gmra.mxu0 %v225
  %v292 = vpop.f32.mrf.mxu0
  %v293 = vadd.f32 %v176, %v292
  %294 = vmatmul.f32.gmra.mxu0 %v228
  %v295 = vpop.f32.mrf.mxu0
  %v296 = vadd.f32 %v179, %v295
  %297 = vmatmul.f32.gmra.mxu0 %v231
  %v298 = vpop.f32.mrf.mxu0
  %v299 = vadd.f32 %v182, %v298
  %300 = vmatmul.f32.gmra.mxu0 %v234
  %v301 = vpop.f32.mrf.mxu0
  %v302 = vadd.f32 %v185, %v301
  %303 = vmatmul.f32.gmra.mxu0 %v237
  %v304 = vpop.f32.mrf.mxu0
  %v305 = vadd.f32 %v188, %v304
  %306 = vmatmul.f32.gmra.mxu0 %v240
  %v307 = vpop.f32.mrf.mxu0
  %v308 = vadd.f32 %v191, %v307
  %309 = vdwg.mxu0
  %v310 = vld [vmem:[%s4] sm:$0x1]
  %v312 = vperm.slane %v310, 0
  %v314 = vadd.f32 %v263, %v312
  %v315 = vadd.f32 %v266, %v312
  %v316 = vadd.f32 %v269, %v312
  %v317 = vadd.f32 %v272, %v312
  %v318 = vadd.f32 %v275, %v312
  %v319 = vadd.f32 %v278, %v312
  %v320 = vadd.f32 %v281, %v312
  %v321 = vadd.f32 %v284, %v312
  %v322 = vadd.f32 %v287, %v312
  %v323 = vadd.f32 %v290, %v312
  %v324 = vadd.f32 %v293, %v312
  %v325 = vadd.f32 %v296, %v312
  %v326 = vadd.f32 %v299, %v312
  %v327 = vadd.f32 %v302, %v312
  %v328 = vadd.f32 %v305, %v312
  %v329 = vadd.f32 %v308, %v312
  %v330 = vmax.f32 %v314, 0.0
  %v331 = vmax.f32 %v315, 0.0
  %v332 = vmax.f32 %v316, 0.0
  %v333 = vmax.f32 %v317, 0.0
  %v334 = vmax.f32 %v318, 0.0
  %v335 = vmax.f32 %v319, 0.0
  %v336 = vmax.f32 %v320, 0.0
  %v337 = vmax.f32 %v321, 0.0
  %v338 = vmax.f32 %v322, 0.0
  %v339 = vmax.f32 %v323, 0.0
  %v340 = vmax.f32 %v324, 0.0
  %v341 = vmax.f32 %v325, 0.0
  %v342 = vmax.f32 %v326, 0.0
  %v343 = vmax.f32 %v327, 0.0
  %v344 = vmax.f32 %v328, 0.0
  %v345 = vmax.f32 %v329, 0.0
  %v346 = vld [vmem:[%s5] sm:$0xff]
  %v347 = vld [vmem:[%s5 + $0x8] sm:$0xff]
  %v348 = vld [vmem:[%s5 + $0x10] sm:$0xff]
  %v349 = vld [vmem:[%s5 + $0x18] sm:$0xff]
  %v350 = vld [vmem:[%s6] sm:$0x1]
  %v352 = vperm.slane %v350, 0
  %vm354 = vcmask 261120
  %v356 = vsel %vm354, %v330, 0
  %v359 = vsel %vm354, %v331, 0
  %v362 = vsel %vm354, %v332, 0
  %v365 = vsel %vm354, %v333, 0
  %v368 = vsel %vm354, %v334, 0
  %v371 = vsel %vm354, %v335, 0
  %v374 = vsel %vm354, %v336, 0
  %v377 = vsel %vm354, %v337, 0
  %v380 = vsel %vm354, %v338, 0
  %v383 = vsel %vm354, %v339, 0
  %v386 = vsel %vm354, %v340, 0
  %v389 = vsel %vm354, %v341, 0
  %v392 = vsel %vm354, %v342, 0
  %v395 = vsel %vm354, %v343, 0
  %v398 = vsel %vm354, %v344, 0
  %v401 = vsel %vm354, %v345, 0
  %403 = vmatpush.msra.mxu0 0.0
  %404 = vmatpush.msra.mxu0 0.0
  %405 = vmatpush.msra.mxu0 0.0
  %406 = vmatpush.msra.mxu0 0.0
  %407 = vmatpush.msra.mxu0 0.0
  %408 = vmatpush.msra.mxu0 0.0
  %409 = vmatpush.msra.mxu0 0.0
  %410 = vmatpush.msra.mxu0 0.0
  %411 = vmatpush.msra.mxu0 0.0
  %412 = vmatpush.msra.mxu0 0.0
  %413 = vmatpush.msra.mxu0 0.0
  %414 = vmatpush.msra.mxu0 0.0
  %415 = vmatpush.msra.mxu0 %v349
  %416 = vmatpush.msra.mxu0 %v348
  %417 = vmatpush.msra.mxu0 %v347
  %418 = vmatpush.msra.mxu0 %v346
  %419 = vmatmul.f32.gmra.mxu0 %v356
  %v420 = vpop.f32.mrf.mxu0
  %v421 = vadd.f32 %v352, %v420
  %422 = vmatmul.f32.gmra.mxu0 %v359
  %v423 = vpop.f32.mrf.mxu0
  %v424 = vadd.f32 %v352, %v423
  %425 = vmatmul.f32.gmra.mxu0 %v362
  %v426 = vpop.f32.mrf.mxu0
  %v427 = vadd.f32 %v352, %v426
  %428 = vmatmul.f32.gmra.mxu0 %v365
  %v429 = vpop.f32.mrf.mxu0
  %v430 = vadd.f32 %v352, %v429
  %431 = vmatmul.f32.gmra.mxu0 %v368
  %v432 = vpop.f32.mrf.mxu0
  %v433 = vadd.f32 %v352, %v432
  %434 = vmatmul.f32.gmra.mxu0 %v371
  %v435 = vpop.f32.mrf.mxu0
  %v436 = vadd.f32 %v352, %v435
  %437 = vmatmul.f32.gmra.mxu0 %v374
  %v438 = vpop.f32.mrf.mxu0
  %v439 = vadd.f32 %v352, %v438
  %440 = vmatmul.f32.gmra.mxu0 %v377
  %v441 = vpop.f32.mrf.mxu0
  %v442 = vadd.f32 %v352, %v441
  %443 = vmatmul.f32.gmra.mxu0 %v380
  %v444 = vpop.f32.mrf.mxu0
  %v445 = vadd.f32 %v352, %v444
  %446 = vmatmul.f32.gmra.mxu0 %v383
  %v447 = vpop.f32.mrf.mxu0
  %v448 = vadd.f32 %v352, %v447
  %449 = vmatmul.f32.gmra.mxu0 %v386
  %v450 = vpop.f32.mrf.mxu0
  %v451 = vadd.f32 %v352, %v450
  %452 = vmatmul.f32.gmra.mxu0 %v389
  %v453 = vpop.f32.mrf.mxu0
  %v454 = vadd.f32 %v352, %v453
  %455 = vmatmul.f32.gmra.mxu0 %v392
  %v456 = vpop.f32.mrf.mxu0
  %v457 = vadd.f32 %v352, %v456
  %458 = vmatmul.f32.gmra.mxu0 %v395
  %v459 = vpop.f32.mrf.mxu0
  %v460 = vadd.f32 %v352, %v459
  %461 = vmatmul.f32.gmra.mxu0 %v398
  %v462 = vpop.f32.mrf.mxu0
  %v463 = vadd.f32 %v352, %v462
  %464 = vmatmul.f32.gmra.mxu0 %v401
  %v465 = vpop.f32.mrf.mxu0
  %v466 = vadd.f32 %v352, %v465
  %467 = vdwg.mxu0
  %v468 = vmax.f32 %v421, 0.0
  %v469 = vmax.f32 %v424, 0.0
  %v470 = vmax.f32 %v427, 0.0
  %v471 = vmax.f32 %v430, 0.0
  %v472 = vmax.f32 %v433, 0.0
  %v473 = vmax.f32 %v436, 0.0
  %v474 = vmax.f32 %v439, 0.0
  %v475 = vmax.f32 %v442, 0.0
  %v476 = vmax.f32 %v445, 0.0
  %v477 = vmax.f32 %v448, 0.0
  %v478 = vmax.f32 %v451, 0.0
  %v479 = vmax.f32 %v454, 0.0
  %v480 = vmax.f32 %v457, 0.0
  %v481 = vmax.f32 %v460, 0.0
  %v482 = vmax.f32 %v463, 0.0
  %v483 = vmax.f32 %v466, 0.0
  %v484 = vld [vmem:[%s7] sm:$0xff]
  %v485 = vld [vmem:[%s7 + $0x8] sm:$0xff]
  %v486 = vld [vmem:[%s7 + $0x10] sm:$0xff]
  %v487 = vld [vmem:[%s7 + $0x18] sm:$0xff]
  %v488 = vld [vmem:[%s8] sm:$0x1]
  %v490 = vperm.slane %v488, 0
  %v493 = vsel %vm354, %v468, 0
  %v496 = vsel %vm354, %v469, 0
  %v499 = vsel %vm354, %v470, 0
  %v502 = vsel %vm354, %v471, 0
  %v505 = vsel %vm354, %v472, 0
  %v508 = vsel %vm354, %v473, 0
  %v511 = vsel %vm354, %v474, 0
  %v514 = vsel %vm354, %v475, 0
  %v517 = vsel %vm354, %v476, 0
  %v520 = vsel %vm354, %v477, 0
  %v523 = vsel %vm354, %v478, 0
  %v526 = vsel %vm354, %v479, 0
  %v529 = vsel %vm354, %v480, 0
  %v532 = vsel %vm354, %v481, 0
  %v535 = vsel %vm354, %v482, 0
  %v538 = vsel %vm354, %v483, 0
  %540 = vmatpush.msra.mxu0 0.0
  %541 = vmatpush.msra.mxu0 0.0
  %542 = vmatpush.msra.mxu0 0.0
  %543 = vmatpush.msra.mxu0 0.0
  %544 = vmatpush.msra.mxu0 0.0
  %545 = vmatpush.msra.mxu0 0.0
  %546 = vmatpush.msra.mxu0 0.0
  %547 = vmatpush.msra.mxu0 0.0
  %548 = vmatpush.msra.mxu0 0.0
  %549 = vmatpush.msra.mxu0 0.0
  %550 = vmatpush.msra.mxu0 0.0
  %551 = vmatpush.msra.mxu0 0.0
  %552 = vmatpush.msra.mxu0 %v487
  %553 = vmatpush.msra.mxu0 %v486
  %554 = vmatpush.msra.mxu0 %v485
  %555 = vmatpush.msra.mxu0 %v484
  %556 = vmatmul.f32.gmra.mxu0 %v493
  %v557 = vpop.f32.mrf.mxu0
  %v558 = vadd.f32 %v490, %v557
  %559 = vmatmul.f32.gmra.mxu0 %v496
  %v560 = vpop.f32.mrf.mxu0
  %v561 = vadd.f32 %v490, %v560
  %562 = vmatmul.f32.gmra.mxu0 %v499
  %v563 = vpop.f32.mrf.mxu0
  %v564 = vadd.f32 %v490, %v563
  %565 = vmatmul.f32.gmra.mxu0 %v502
  %v566 = vpop.f32.mrf.mxu0
  %v567 = vadd.f32 %v490, %v566
  %568 = vmatmul.f32.gmra.mxu0 %v505
  %v569 = vpop.f32.mrf.mxu0
  %v570 = vadd.f32 %v490, %v569
  %571 = vmatmul.f32.gmra.mxu0 %v508
  %v572 = vpop.f32.mrf.mxu0
  %v573 = vadd.f32 %v490, %v572
  %574 = vmatmul.f32.gmra.mxu0 %v511
  %v575 = vpop.f32.mrf.mxu0
  %v576 = vadd.f32 %v490, %v575
  %577 = vmatmul.f32.gmra.mxu0 %v514
  %v578 = vpop.f32.mrf.mxu0
  %v579 = vadd.f32 %v490, %v578
  %580 = vmatmul.f32.gmra.mxu0 %v517
  %v581 = vpop.f32.mrf.mxu0
  %v582 = vadd.f32 %v490, %v581
  %583 = vmatmul.f32.gmra.mxu0 %v520
  %v584 = vpop.f32.mrf.mxu0
  %v585 = vadd.f32 %v490, %v584
  %586 = vmatmul.f32.gmra.mxu0 %v523
  %v587 = vpop.f32.mrf.mxu0
  %v588 = vadd.f32 %v490, %v587
  %589 = vmatmul.f32.gmra.mxu0 %v526
  %v590 = vpop.f32.mrf.mxu0
  %v591 = vadd.f32 %v490, %v590
  %592 = vmatmul.f32.gmra.mxu0 %v529
  %v593 = vpop.f32.mrf.mxu0
  %v594 = vadd.f32 %v490, %v593
  %595 = vmatmul.f32.gmra.mxu0 %v532
  %v596 = vpop.f32.mrf.mxu0
  %v597 = vadd.f32 %v490, %v596
  %598 = vmatmul.f32.gmra.mxu0 %v535
  %v599 = vpop.f32.mrf.mxu0
  %v600 = vadd.f32 %v490, %v599
  %601 = vmatmul.f32.gmra.mxu0 %v538
  %v602 = vpop.f32.mrf.mxu0
  %v603 = vadd.f32 %v490, %v602
  %604 = vdwg.mxu0
  %v605 = vmax.f32 %v558, 0.0
  %v606 = vmax.f32 %v561, 0.0
  %v607 = vmax.f32 %v564, 0.0
  %v608 = vmax.f32 %v567, 0.0
  %v609 = vmax.f32 %v570, 0.0
  %v610 = vmax.f32 %v573, 0.0
  %v611 = vmax.f32 %v576, 0.0
  %v612 = vmax.f32 %v579, 0.0
  %v613 = vmax.f32 %v582, 0.0
  %v614 = vmax.f32 %v585, 0.0
  %v615 = vmax.f32 %v588, 0.0
  %v616 = vmax.f32 %v591, 0.0
  %v617 = vmax.f32 %v594, 0.0
  %v618 = vmax.f32 %v597, 0.0
  %v619 = vmax.f32 %v600, 0.0
  %v620 = vmax.f32 %v603, 0.0
  %v621 = vld [vmem:[%s9] sm:$0x1]
  %v623 = vperm.slane %v621, 0
  %v625 = vmul.f32 %v605, %v623
  %v626 = vmul.f32 %v606, %v623
  %v627 = vmul.f32 %v607, %v623
  %v628 = vmul.f32 %v608, %v623
  %v629 = vmul.f32 %v609, %v623
  %v630 = vmul.f32 %v610, %v623
  %v631 = vmul.f32 %v611, %v623
  %v632 = vmul.f32 %v612, %v623
  %v633 = vmul.f32 %v613, %v623
  %v634 = vmul.f32 %v614, %v623
  %v635 = vmul.f32 %v615, %v623
  %v636 = vmul.f32 %v616, %v623
  %v637 = vmul.f32 %v617, %v623
  %v638 = vmul.f32 %v618, %v623
  %v639 = vmul.f32 %v619, %v623
  %v640 = vmul.f32 %v620, %v623
  %v641 = vsel %vm354, %v625, 0.0
  %642 = vadd.xlane.f32.xlu0 %v641
  %v643 = vpop.xlane.xlu0 %642
  %v644 = vsel %vm354, %v626, 0.0
  %645 = vadd.xlane.f32.xlu0 %v644
  %v646 = vpop.xlane.xlu0 %645
  %v647 = vsel %vm354, %v627, 0.0
  %648 = vadd.xlane.f32.xlu0 %v647
  %v649 = vpop.xlane.xlu0 %648
  %v650 = vsel %vm354, %v628, 0.0
  %651 = vadd.xlane.f32.xlu0 %v650
  %v652 = vpop.xlane.xlu0 %651
  %v653 = vsel %vm354, %v629, 0.0
  %654 = vadd.xlane.f32.xlu0 %v653
  %v655 = vpop.xlane.xlu0 %654
  %v656 = vsel %vm354, %v630, 0.0
  %657 = vadd.xlane.f32.xlu0 %v656
  %v658 = vpop.xlane.xlu0 %657
  %v659 = vsel %vm354, %v631, 0.0
  %660 = vadd.xlane.f32.xlu0 %v659
  %v661 = vpop.xlane.xlu0 %660
  %v662 = vsel %vm354, %v632, 0.0
  %663 = vadd.xlane.f32.xlu0 %v662
  %v664 = vpop.xlane.xlu0 %663
  %v665 = vsel %vm354, %v633, 0.0
  %666 = vadd.xlane.f32.xlu0 %v665
  %v667 = vpop.xlane.xlu0 %666
  %v668 = vsel %vm354, %v634, 0.0
  %669 = vadd.xlane.f32.xlu0 %v668
  %v670 = vpop.xlane.xlu0 %669
  %v671 = vsel %vm354, %v635, 0.0
  %672 = vadd.xlane.f32.xlu0 %v671
  %v673 = vpop.xlane.xlu0 %672
  %v674 = vsel %vm354, %v636, 0.0
  %675 = vadd.xlane.f32.xlu0 %v674
  %v676 = vpop.xlane.xlu0 %675
  %v677 = vsel %vm354, %v637, 0.0
  %678 = vadd.xlane.f32.xlu0 %v677
  %v679 = vpop.xlane.xlu0 %678
  %v680 = vsel %vm354, %v638, 0.0
  %681 = vadd.xlane.f32.xlu0 %v680
  %v682 = vpop.xlane.xlu0 %681
  %v683 = vsel %vm354, %v639, 0.0
  %684 = vadd.xlane.f32.xlu0 %v683
  %v685 = vpop.xlane.xlu0 %684
  %v686 = vsel %vm354, %v640, 0.0
  %687 = vadd.xlane.f32.xlu0 %v686
  %v688 = vpop.xlane.xlu0 %687
  %v689 = vld [vmem:[#allocation2] sm:$0x1]
  %v691 = vperm.slane %v689, 0
  %v693 = vadd.f32 %v643, %v691
  %v694 = vadd.f32 %v646, %v691
  %v695 = vadd.f32 %v649, %v691
  %v696 = vadd.f32 %v652, %v691
  %v697 = vadd.f32 %v655, %v691
  %v698 = vadd.f32 %v658, %v691
  %v699 = vadd.f32 %v661, %v691
  %v700 = vadd.f32 %v664, %v691
  %v701 = vadd.f32 %v667, %v691
  %v702 = vadd.f32 %v670, %v691
  %v703 = vadd.f32 %v673, %v691
  %v704 = vadd.f32 %v676, %v691
  %v705 = vadd.f32 %v679, %v691
  %v706 = vadd.f32 %v682, %v691
  %v707 = vadd.f32 %v685, %v691
  %v708 = vadd.f32 %v688, %v691
  %vm709 = vcmask 7168
  %710 = vst.msk [vmem:[%s11] sm:$0xff] %vm709, %v693
  %711 = vst.msk [vmem:[%s11 + $0x8] sm:$0xff] %vm709, %v694
  %712 = vst.msk [vmem:[%s11 + $0x10] sm:$0xff] %vm709, %v695
  %713 = vst.msk [vmem:[%s11 + $0x18] sm:$0xff] %vm709, %v696
  %714 = vst.msk [vmem:[%s11 + $0x20] sm:$0xff] %vm709, %v697
  %715 = vst.msk [vmem:[%s11 + $0x28] sm:$0xff] %vm709, %v698
  %716 = vst.msk [vmem:[%s11 + $0x30] sm:$0xff] %vm709, %v699
  %717 = vst.msk [vmem:[%s11 + $0x38] sm:$0xff] %vm709, %v700
  %718 = vst.msk [vmem:[%s11 + $0x40] sm:$0xff] %vm709, %v701
  %719 = vst.msk [vmem:[%s11 + $0x48] sm:$0xff] %vm709, %v702
  %720 = vst.msk [vmem:[%s11 + $0x50] sm:$0xff] %vm709, %v703
  %721 = vst.msk [vmem:[%s11 + $0x58] sm:$0xff] %vm709, %v704
  %722 = vst.msk [vmem:[%s11 + $0x60] sm:$0xff] %vm709, %v705
  %723 = vst.msk [vmem:[%s11 + $0x68] sm:$0xff] %vm709, %v706
  %724 = vst.msk [vmem:[%s11 + $0x70] sm:$0xff] %vm709, %v707
  %725 = vst.msk [vmem:[%s11 + $0x78] sm:$0xff] %vm709, %v708
  // Predicated region
  $region46: #{tpu_custom_call.1} parent=0 // pred_check
    _
  $region47: #{tpu_custom_call.1} parent=0 // pred_check_branch
    %727 = sbr.rel (0) target = $region49
  $region48: #{tpu_custom_call.1} parent=0 // pred_region
    _
  $region49: #{tpu_custom_call.1} parent=0 // pred_fallthru
    _
  // Predicated region
  $region50: #{tpu_custom_call.1} parent=0 // pred_check
    _
  $region51: #{tpu_custom_call.1} parent=0 // pred_check_branch
    %729 = sbr.rel (0) target = $region53
  $region52: #{tpu_custom_call.1} parent=0 // pred_region
    _
  $region53: #{tpu_custom_call.1} parent=0 // pred_fallthru
    _

</llo_original>
